<compile_context>
chip_gen: v5e
topology: v5e:2x2
jax: 0.10.0
libtpu: 0.0.40
codegen_flags: <defaults>
</compile_context>

<pallas_src>
import re

import jax
import jax.numpy as jnp
from jax import lax
from jax.experimental import pallas as pl
from jax.experimental.pallas import tpu as pltpu

EPS = 1e-10
_MiB = 1024 * 1024


# --------------------------------------------------------------------------
# Generation-aware parameters
# --------------------------------------------------------------------------
def _tpu_generation() -> int:
    """Best-effort TPU generation from device_kind ('TPU v6e' -> 6). 0 if unknown."""
    try:
        kind = jax.devices()[0].device_kind
        m = re.search(r"(\d+)", kind)
        return int(m.group(1)) if m else 0
    except Exception:  # pragma: no cover - defensive
        return 0


def _gen_params():
    """Returns (vmem_limit_bytes, block_byte_budget, row_axis_semantics)."""
    gen = _tpu_generation()
    if gen >= 7:
        # v7x: 64 MiB physical VMEM per TC, 2 TCs -> shard rows across cores.
        return 48 * _MiB, 36 * _MiB, getattr(pltpu, "CORE_PARALLEL", pltpu.PARALLEL)
    if gen in (5, 6):
        # v5e/v5p/v6e: 128 MiB physical VMEM, single TensorCore.
        return 64 * _MiB, 48 * _MiB, pltpu.PARALLEL
    # Unknown / older (v4 etc.): stay conservative.
    return 32 * _MiB, 20 * _MiB, pltpu.PARALLEL


def _choose_tiles(N, D, itemsize, budget_bytes, tile_d=None):
    """Pick (tile_n, tile_d).  tile_d is None for the single-pass (full-D) path."""
    sublane = max(8, 32 // itemsize)          # 8 for f32, 16 for bf16, 32 for int8
    # Per element resident in VMEM: double-buffered input + output blocks
    # (2 + 2) * itemsize plus ~2 f32-sized in-kernel temporaries (the f32
    # upcast and the f32 product before the store).
    per_elem = 4 * itemsize + 8
    budget_elems = max(sublane * 128, budget_bytes // per_elem)
    n_pad = ((N + sublane - 1) // sublane) * sublane

    if tile_d is None:
        tn = (budget_elems // max(D, 1)) // sublane * sublane
        if tn >= sublane:
            return min(tn, n_pad), None        # single-pass: whole rows per block
        # Even one sublane group of rows over the full D exceeds the budget:
        # tile the feature axis too (two-pass path).
        tile_d = min(((D + 127) // 128) * 128, 4096)
    tn = max(sublane, (budget_elems // tile_d) // sublane * sublane)
    return min(tn, n_pad), tile_d


def _compiler_params(sems, vmem_limit):
    kwargs = {"dimension_semantics": tuple(sems)}
    if vmem_limit is not None:
        kwargs["vmem_limit_bytes"] = int(vmem_limit)
    return pltpu.CompilerParams(**kwargs)


# --------------------------------------------------------------------------
# Kernels
# --------------------------------------------------------------------------
def _l2norm_kernel(x_ref, o_ref):
    """Single-pass: one (tile_n, D) tile, reduce over D, scale, store."""
    xf = x_ref[...].astype(jnp.float32)
    ssq = jnp.sum(xf * xf, axis=1, keepdims=True)     # (tile_n, 1) f32
    inv = lax.rsqrt(ssq + EPS)                        # EUP rsqrt
    # Multiply in f32 (free on the HBM-bound roofline; avoids rounding inv
    # to bf16); only the store narrows to the output dtype.
    o_ref[...] = (xf * inv).astype(o_ref.dtype)


def _make_ssq_kernel(D, tile_d):
    """Wide-D pass 1: accumulate sum-of-squares over D tiles, emit 1/norm."""
    ragged = (D % tile_d) != 0

    def kernel(x_ref, inv_ref, acc_ref):
        k = pl.program_id(1)

        @pl.when(k == 0)
        def _():
            acc_ref[...] = jnp.zeros_like(acc_ref)

        xf = x_ref[...].astype(jnp.float32)
        if ragged:
            # Mask out-of-bounds columns of the last D block (padding is
            # undefined and must not pollute the reduction).
            col = k * tile_d + lax.broadcasted_iota(jnp.int32, xf.shape, 1)
            xf = jnp.where(col < D, xf, 0.0)
        acc_ref[...] += jnp.sum(xf * xf, axis=1, keepdims=True)

        @pl.when(k == pl.num_programs(1) - 1)
        def _():
            inv_ref[...] = lax.rsqrt(acc_ref[...] + EPS)

    return kernel


def _scale_kernel(x_ref, inv_ref, o_ref):
    """Wide-D pass 2: out = x * (1/norm), broadcast over the D tile."""
    o_ref[...] = (x_ref[...].astype(jnp.float32) * inv_ref[...]).astype(o_ref.dtype)


# --------------------------------------------------------------------------
# Wrappers
# --------------------------------------------------------------------------
def _l2norm_single(x, tile_n, row_sem, vmem_limit):
    N, D = x.shape
    itemsize = jnp.dtype(x.dtype).itemsize
    return pl.pallas_call(
        _l2norm_kernel,
        out_shape=jax.ShapeDtypeStruct((N, D), x.dtype),
        grid_spec=pltpu.PrefetchScalarGridSpec(
            num_scalar_prefetch=0,
            grid=(pl.cdiv(N, tile_n),),
            in_specs=[pl.BlockSpec((tile_n, D), lambda i: (i, 0))],
            out_specs=pl.BlockSpec((tile_n, D), lambda i: (i, 0)),
        ),
        compiler_params=_compiler_params((row_sem,), vmem_limit),
        cost_estimate=pl.CostEstimate(
            flops=3 * N * D, transcendentals=N,
            bytes_accessed=2 * N * D * itemsize),
    )(x)


def _l2norm_two_pass(x, tile_n, tile_d, row_sem, vmem_limit):
    N, D = x.shape
    itemsize = jnp.dtype(x.dtype).itemsize
    grid = (pl.cdiv(N, tile_n), pl.cdiv(D, tile_d))

    inv = pl.pallas_call(
        _make_ssq_kernel(D, tile_d),
        out_shape=jax.ShapeDtypeStruct((N, 1), jnp.float32),
        grid_spec=pltpu.PrefetchScalarGridSpec(
            num_scalar_prefetch=0,
            grid=grid,
            in_specs=[pl.BlockSpec((tile_n, tile_d), lambda i, k: (i, k))],
            out_specs=pl.BlockSpec((tile_n, 1), lambda i, k: (i, 0)),
            scratch_shapes=[pltpu.VMEM((tile_n, 1), jnp.float32)],
        ),
        compiler_params=_compiler_params((row_sem, pltpu.ARBITRARY), vmem_limit),
        cost_estimate=pl.CostEstimate(
            flops=2 * N * D, transcendentals=N,
            bytes_accessed=N * D * itemsize + N * 4),
    )(x)

    return pl.pallas_call(
        _scale_kernel,
        out_shape=jax.ShapeDtypeStruct((N, D), x.dtype),
        grid_spec=pltpu.PrefetchScalarGridSpec(
            num_scalar_prefetch=0,
            grid=grid,
            in_specs=[pl.BlockSpec((tile_n, tile_d), lambda i, k: (i, k)),
                      pl.BlockSpec((tile_n, 1), lambda i, k: (i, 0))],
            out_specs=pl.BlockSpec((tile_n, tile_d), lambda i, k: (i, k)),
        ),
        compiler_params=_compiler_params((row_sem, pltpu.PARALLEL), vmem_limit),
        cost_estimate=pl.CostEstimate(
            flops=N * D, transcendentals=0,
            bytes_accessed=2 * N * D * itemsize + N * 4),
    )(x, inv)


def l2norm(x: jax.Array, *, tile_n: int | None = None,
           tile_d: int | None = None) -> jax.Array:
    """Row-wise L2 normalization: out[n, :] = x[n, :] / sqrt(sum_d x[n,d]^2 + eps)."""
    assert x.ndim == 2, "L2Norm forward is only well-defined for 2-D input [N, D]"
    N, D = x.shape
    itemsize = jnp.dtype(x.dtype).itemsize
    vmem_limit, budget, row_sem = _gen_params()

    auto_tn, auto_td = _choose_tiles(N, D, itemsize, budget, tile_d)
    if tile_n is None:
        tile_n = auto_tn
    if tile_d is None:
        tile_d = auto_td

    def run(rs):
        if tile_d is None:
            return _l2norm_single(x, tile_n, rs, vmem_limit)
        return _l2norm_two_pass(x, tile_n, tile_d, rs, vmem_limit)

    if row_sem is not pltpu.PARALLEL:
        # CORE_PARALLEL (v7x dual-TC sharding) with a safe fallback: if the
        # installed Mosaic rejects it, re-lower with plain PARALLEL.
        try:
            return run(row_sem)
        except Exception:  # pragma: no cover - fallback path
            pass
    return run(pltpu.PARALLEL)


def l2norm_ref(x: jax.Array) -> jax.Array:
    """Pure-JAX reference matching the PyTorch module (math in f32)."""
    xf = x.astype(jnp.float32)
    norm = jnp.sqrt(jnp.sum(xf * xf, axis=1) + EPS)
    return (xf / norm[:, None]).astype(x.dtype)


if __name__ == "__main__":
    key = jax.random.PRNGKey(0)
    k1, k2, k3, k4, k5 = jax.random.split(key, 5)

    # f32, evenly tiled (single-pass path).
    x1 = jax.random.normal(k1, (8, 32), dtype=jnp.float32)
    out1 = l2norm(x1)
    jax.block_until_ready(out1)
    assert out1.shape == x1.shape and out1.dtype == x1.dtype
    assert jnp.allclose(out1, l2norm_ref(x1), atol=1e-6, rtol=1e-5), "f32 mismatch"

    # Ragged row count (pl.cdiv grid + masked tail rows).
    x2 = jax.random.normal(k2, (13, 32), dtype=jnp.float32)
    out2 = l2norm(x2)
    jax.block_until_ready(out2)
    assert jnp.allclose(out2, l2norm_ref(x2), atol=1e-6, rtol=1e-5), "ragged-N mismatch"

    # bf16 (16-row sublane minimum; f32 math in-kernel, bf16 store).
    x3 = jax.random.normal(k3, (16, 32), dtype=jnp.bfloat16)
    out3 = l2norm(x3)
    jax.block_until_ready(out3)
    assert out3.dtype == jnp.bfloat16
    assert jnp.allclose(out3.astype(jnp.float32), l2norm_ref(x3).astype(jnp.float32),
                        atol=2e-2, rtol=2e-2), "bf16 mismatch"

    # Forced wide-D two-pass path, ragged D tail (exercises the column mask).
    x4 = jax.random.normal(k4, (16, 320), dtype=jnp.float32)
    out4 = l2norm(x4, tile_n=8, tile_d=128)
    jax.block_until_ready(out4)
    assert jnp.allclose(out4, l2norm_ref(x4), atol=1e-6, rtol=1e-5), "wide-D f32 mismatch"

    # Forced wide-D two-pass path in bf16.
    x5 = jax.random.normal(k5, (32, 256), dtype=jnp.bfloat16)
    out5 = l2norm(x5, tile_n=16, tile_d=128)
    jax.block_until_ready(out5)
    assert jnp.allclose(out5.astype(jnp.float32), l2norm_ref(x5).astype(jnp.float32),
                        atol=2e-2, rtol=2e-2), "wide-D bf16 mismatch"

    print("KERNEL_OK")
</pallas_src>

<mosaic_0001>
module attributes {stable_mosaic.version = 11 : i64} {
  func.func @_l2norm_kernel(%arg0: i32, %arg1: memref<8x32xf32, #tpu.memory_space<vmem>>, %arg2: memref<8x32xf32, #tpu.memory_space<vmem>>) attributes {dimension_semantics = [#tpu.dimension_semantics<parallel>], iteration_bounds = array<i64: 1>, scalar_prefetch = 0 : i64, scratch_operands = 0 : i64, tpu.core_type = #tpu.core_type<tc>, window_params = [{transform_indices = @transform_0, window_bounds = array<i64: 8, 32>}, {transform_indices = @transform_1, window_bounds = array<i64: 8, 32>}]} {
    %c0 = arith.constant 0 : index
    %c0_0 = arith.constant 0 : index
    %0 = vector.load %arg1[%c0, %c0_0] : memref<8x32xf32, #tpu.memory_space<vmem>>, vector<8x32xf32>
    %1 = arith.mulf %0, %0 : vector<8x32xf32>
    %cst = arith.constant dense<0.000000e+00> : vector<8xf32>
    %2 = vector.multi_reduction <add>, %1, %cst [1] : vector<8x32xf32> to vector<8xf32>
    %3 = vector.shape_cast %2 : vector<8xf32> to vector<8x1xf32>
    %cst_1 = arith.constant 1.000000e-10 : f32
    %4 = vector.broadcast %cst_1 : f32 to vector<8x1xf32>
    %5 = arith.addf %3, %4 : vector<8x1xf32>
    %6 = math.rsqrt %5 : vector<8x1xf32>
    %7 = vector.broadcast %6 : vector<8x1xf32> to vector<8x32xf32>
    %8 = arith.mulf %0, %7 : vector<8x32xf32>
    %c0_2 = arith.constant 0 : index
    %c0_3 = arith.constant 0 : index
    %9 = vector.load %arg2[%c0_2, %c0_3] : memref<8x32xf32, #tpu.memory_space<vmem>>, vector<8x32xf32>
    tpu.vector_store %arg2[%c0_2, %c0_3], %8 {strides = array<i32>} : memref<8x32xf32, #tpu.memory_space<vmem>>, vector<8x32xf32>,
    return
  }
  func.func @transform_0(%arg0: i32) -> (i32, i32) {
    %c0_i32 = arith.constant 0 : i32
    %c0_i32_0 = arith.constant 0 : i32
    return %arg0, %c0_i32 : i32, i32
  }
  func.func @transform_1(%arg0: i32) -> (i32, i32) {
    %c0_i32 = arith.constant 0 : i32
    %c0_i32_0 = arith.constant 0 : i32
    return %arg0, %c0_i32 : i32, i32
  }
}

</mosaic_0001>

<llo_original>
// kernel: tpu_custom_call.1
$region0: #{tpu_custom_call.1}
  #allocation0 [shape = 'u32[]', space=smem, size = 0x4, offset = 0x4, fixed_abs, tag = 'smem constant byte address 0x4 - core index']
  #allocation1 [shape = 'u32[72,128]{1,0:T(1,128)}', space=vmem, size = 0x9000, scoped, tag = 'internal scratch']
  %s0 = inlined_call_operand.hbm [shape: f32[8,32], index: 0, kind: input, shape index: {}]
  %s1 = inlined_call_operand.hbm [shape: f32[8,32], index: 1, kind: output, shape index: {}]
  %s2 = sld [smem:[#allocation0]]
  $region18: #{tpu_custom_call.1} parent=0
    _
  %s4 = ssub.s32 1, %s2
  %s5 = scalar_select 0, %s4, %s2
  $region1: #{tpu_custom_call.1} parent=0
    #allocation2 [shape = 'u8[4096]{0}', space=vmem, size = 0x1000, scoped, tag = 'input window, operand 0, single buffered']
    #allocation3 [shape = 's32[1]{0}', space=sflag, size = 0x4, scoped, tag = 'scoped memory for tpu_custom_call.1']
    #allocation4 [shape = 's32[1]{0}', space=sflag, size = 0x4, scoped, tag = 'scoped memory for tpu_custom_call.1']
    #allocation5 [shape = 'u8[4096]{0}', space=vmem, size = 0x1000, scoped, tag = 'output window, operand 0, single buffered']
    %6 = vsyncpa [#allocation3], 0
    %7 = vsyncpa [#allocation4], 0
    // Predicated region
    $region2: #{tpu_custom_call.1} parent=1 // pred_check
      _
    $region3: #{tpu_custom_call.1} parent=1 // pred_check_branch
      %9 = sbr.rel (0) target = $region5
    $region4: #{tpu_custom_call.1} parent=1 // pred_region
      %11 = vsyncadd [#allocation3], 0
      %s13 = sshll.u32 %s0, 4
      %s14 = int_to_ptr.hbm [resolvable:$true] %s13
      %s15 = sshll.u32 [#allocation2], 4
      %s16 = int_to_ptr.vmem [resolvable:$true] %s15
      %18 = dma.hbm_to_vmem [thread:$0]  %s14, 128, %s16, [#allocation3]
    $region5: #{tpu_custom_call.1} parent=1 // pred_fallthru
      _
    // Predicated region
    $region6: #{tpu_custom_call.1} parent=1 // pred_check
      _
    $region7: #{tpu_custom_call.1} parent=1 // pred_check_branch
      %20 = sbr.rel (0) target = $region9
    $region8: #{tpu_custom_call.1} parent=1 // pred_region
      %22 = dma.done [#allocation3], 128
    $region9: #{tpu_custom_call.1} parent=1 // pred_fallthru
      _
    %v23 = vld [vmem:[#allocation2] sm:$0xff]
    %v24 = vmul.f32 %v23, %v23
    %vm25 = vcmask 261120
    %v26 = vsel %vm25, %v24, 0.0
    %27 = vadd.xlane.f32.xlu0 %v26
    %v28 = vpop.xlane.xlu0 %27
    %v29 = vadd.f32 %v28, 1e-10
    %v30 = vrsqrt.pop %v29
    %v31 = vmul.f32 %v30, %v29
    %v32 = vmul.f32 %v31, %v30
    %v33 = vmul.f32 0.5, %v32
    %v34 = vsub.f32 1.5, %v33
    %v35 = vmul.f32 %v30, %v34
    %vm36 = vweird.f32 %v29
    %vm37 = vweird.f32 %v30
    %vm38 = vmor %vm36, %vm37
    %v39 = vsel %vm38, %v30, %v35
    %v40 = vmul.f32 %v23, %v39
    %41 = vst.msk [vmem:[#allocation5] sm:$0xff] %vm25, %v40
    // Predicated region
    $region10: #{tpu_custom_call.1} parent=1 // pred_check
      _
    $region11: #{tpu_custom_call.1} parent=1 // pred_check_branch
      %43 = sbr.rel (0) target = $region13
    $region12: #{tpu_custom_call.1} parent=1 // pred_region
      %45 = vsyncadd [#allocation4], 0
      %s47 = sshll.u32 [#allocation5], 4
      %s48 = int_to_ptr.vmem [resolvable:$true] %s47
      %s49 = sshll.u32 %s1, 4
      %s50 = int_to_ptr.hbm [resolvable:$true] %s49
      %52 = dma.vmem_to_hbm [thread:$0]  %s48, 128, %s50, [#allocation4]
    $region13: #{tpu_custom_call.1} parent=1 // pred_fallthru
      _
    // Predicated region
    $region14: #{tpu_custom_call.1} parent=1 // pred_check
      _
    $region15: #{tpu_custom_call.1} parent=1 // pred_check_branch
      %54 = sbr.rel (0) target = $region17
    $region16: #{tpu_custom_call.1} parent=1 // pred_region
      %56 = dma.done [#allocation4], 128
    $region17: #{tpu_custom_call.1} parent=1 // pred_fallthru
      _
    %57 = vsyncpa [#allocation3], 1
    %58 = vsyncpa [#allocation4], 1

</llo_original>
